<compile_context>
chip_gen: v5e
topology: v5e:2x2
jax: 0.10.0
libtpu: 0.0.40
codegen_flags: <defaults>
</compile_context>

<pallas_src>
import functools

import jax
import jax.numpy as jnp
from jax.experimental import pallas as pl
from jax.experimental.pallas import tpu as pltpu


# -----------------------------------------------------------------------------
# Kernel
# -----------------------------------------------------------------------------
def _layernorm_kernel(x_ref, w_ref, b_ref, o_ref, *, eps, h, k):
    """LayerNorm over the last `h` features of each logical row.

    x_ref : (TM, k*h) tile.  k == 1: one logical row per physical row.
            k > 1 (lane packing for h < 128): each physical row holds k
            independent logical rows side by side, so DMA loads/stores stay
            lane-dense; statistics are computed per h-lane segment.
    w_ref, b_ref : (1, h) float32 (pre-cast in the wrapper).
    """
    x = x_ref[...].astype(jnp.float32)
    w = w_ref[...]
    b = b_ref[...]
    inv_h = 1.0 / float(h)

    def _norm(seg):
        # Two-pass statistics: mean first, then variance of (x - mean).
        # Avoids the catastrophic cancellation of E[x^2] - mean^2; the extra
        # VPU/XLU pass is free at the HBM roofline.
        mean = jnp.sum(seg, axis=-1, keepdims=True) * inv_h
        d = seg - mean
        var = jnp.sum(d * d, axis=-1, keepdims=True) * inv_h
        return d * jax.lax.rsqrt(var + eps) * w + b

    if k == 1:
        o_ref[...] = _norm(x).astype(o_ref.dtype)
    else:
        # Static (unrolled) loop over the k lane segments (k <= 16).  Slices
        # and the final concatenate are static lane-offset ops; the single
        # full-width store keeps the writeback lane-dense.
        ys = [_norm(x[:, s * h:(s + 1) * h]) for s in range(k)]
        o_ref[...] = jnp.concatenate(ys, axis=-1).astype(o_ref.dtype)


# -----------------------------------------------------------------------------
# Tiling helpers
# -----------------------------------------------------------------------------
def _sublane_multiple(dtype) -> int:
    # Sub-32-bit dtypes pack along sublanes: f32 -> 8, bf16/f16 -> 16, int8 -> 32.
    itemsize = jnp.dtype(dtype).itemsize
    return max(8, 8 * (4 // max(itemsize, 1)))


def _round_up(x, m):
    return ((x + m - 1) // m) * m


def _vmem_budgets():
    """Generation-aware VMEM budgeting (v5e/v6e: 128 MiB, v7x: 64 MiB per TC)."""
    cap = None
    try:
        cap = getattr(pltpu.get_tpu_info(), "vmem_capacity_bytes", None)
    except Exception:
        cap = None
    if not cap:
        cap = 64 * 1024 * 1024  # conservative fallback = v7x per-TensorCore VMEM
    return int(0.35 * cap), int(0.70 * cap)  # (buffer budget, vmem_limit_bytes)


def _pick_tile_rows(rows, width, dtype, budget, *, min_steps=4, max_rows=16384):
    """Largest sublane-aligned row tile fitting the VMEM budget, capped so the
    row grid keeps >= min_steps steps (both v7x TensorCores fed + pipelining)."""
    sub = _sublane_multiple(dtype)
    itemsize = jnp.dtype(dtype).itemsize
    # 2x double-buffered input tiles + 2x output tiles (input dtype) plus
    # ~3 f32 tile-sized compute temporaries (x_f32, d, y).
    bytes_per_row = width * (4 * itemsize + 3 * 4)
    tile = max(budget // max(bytes_per_row, 1), sub)
    tile = min(tile, max_rows)
    step_cap = max(_round_up(pl.cdiv(rows, min_steps), sub), sub)
    tile = min(tile, step_cap)
    tile = max((tile // sub) * sub, sub)
    return int(tile), sub


def _make_x_spec(tile_rows, width, *, deep_pipeline):
    index_map = lambda i: (i, 0)
    if deep_pipeline and hasattr(pl, "Buffered"):
        try:
            return pl.BlockSpec((tile_rows, width), index_map,
                                pipeline_mode=pl.Buffered(3))
        except TypeError:  # older BlockSpec without pipeline_mode
            pass
    return pl.BlockSpec((tile_rows, width), index_map)


# -----------------------------------------------------------------------------
# Public wrapper: forward of IpexFastLayerNorm
# -----------------------------------------------------------------------------
def ipex_fast_layer_norm(x, weight, bias, eps=1e-5):
    """LayerNorm over the last dim of x with affine weight/bias.

    x: [..., H], weight: [H], bias: [H]
    """
    orig_shape = x.shape
    H = orig_shape[-1]
    assert weight.shape == (H,) and bias.shape == (H,)

    x2d = x.reshape(-1, H)
    R = x2d.shape[0]
    itemsize = jnp.dtype(x.dtype).itemsize

    # ---- Lane packing for small H ------------------------------------------
    k = 1
    if H < 128 and 128 % H == 0 and (128 // H) <= 16:
        k_cand = 128 // H
        pad_rows = (-R) % k_cand
        # Padding a huge array to a row multiple of k costs an extra HBM pass;
        # only accept it when the array is small or already aligned.
        if pad_rows == 0 or R * H * itemsize <= (32 << 20):
            k = k_cand
            if pad_rows:
                x2d = jnp.pad(x2d, ((0, pad_rows), (0, 0)))
            x2d = x2d.reshape(x2d.shape[0] // k, k * H)  # contiguous reshape: free

    rows, width = x2d.shape

    # ---- Tile selection ------------------------------------------------------
    budget, vmem_limit = _vmem_budgets()
    tile_rows, sub = _pick_tile_rows(rows, width, x.dtype, budget)

    rows_pad = rows
    if rows < tile_rows:
        # Tiny inputs: shrink the tile to the sublane-rounded row count and pad
        # those few rows (cheap).  Large inputs never pad: the ragged last
        # block is handled by Pallas (garbage reads stay in their own rows,
        # out-of-bounds stores are dropped).
        tile_rows = _round_up(rows, sub)
        rows_pad = tile_rows
        x2d = jnp.pad(x2d, ((0, rows_pad - rows), (0, 0)))

    num_tiles = pl.cdiv(rows_pad, tile_rows)

    w2d = weight.astype(jnp.float32).reshape(1, H)
    b2d = bias.astype(jnp.float32).reshape(1, H)

    # Extra pipeline depth only pays off for small per-step DMAs with enough steps.
    tile_bytes = tile_rows * width * itemsize
    deep_pipeline = (tile_bytes < (512 << 10)) and (num_tiles >= 3)

    # TODO(synk): for extremely large H (single-row tiles approaching the VMEM
    # budget) an H-chunked two-pass variant (accumulate sum / centered sumsq in
    # VMEM scratch over an "arbitrary" H grid axis, then a second apply pass)
    # would keep multi-MiB DMAs; not needed for typical LayerNorm widths.

    out = pl.pallas_call(
        functools.partial(_layernorm_kernel, eps=float(eps), h=H, k=k),
        out_shape=jax.ShapeDtypeStruct((rows_pad, width), x.dtype),
        grid=(num_tiles,),
        in_specs=[
            _make_x_spec(tile_rows, width, deep_pipeline=deep_pipeline),
            pl.BlockSpec((1, H), lambda i: (0, 0)),
            pl.BlockSpec((1, H), lambda i: (0, 0)),
        ],
        out_specs=pl.BlockSpec((tile_rows, width), lambda i: (i, 0)),
        compiler_params=pltpu.CompilerParams(
            dimension_semantics=("parallel",),  # shard rows across TCs on v7x
            vmem_limit_bytes=vmem_limit,        # generation-aware scoped limit
        ),
    )(x2d, w2d, b2d)

    if rows_pad != rows:
        out = out[:rows]
    if k > 1:
        out = out.reshape(rows * k, H)
        if rows * k != R:
            out = out[:R]
    return out.reshape(orig_shape)


# -----------------------------------------------------------------------------
# Reference + self-test
# -----------------------------------------------------------------------------
def _reference_layer_norm(x, weight, bias, eps):
    xf = x.astype(jnp.float32)
    mean = jnp.mean(xf, axis=-1, keepdims=True)
    var = jnp.mean((xf - mean) ** 2, axis=-1, keepdims=True)
    y = (xf - mean) * jax.lax.rsqrt(var + eps) * weight + bias
    return y.astype(x.dtype)


if __name__ == "__main__":
    key = jax.random.PRNGKey(0)
    eps = 1e-5

    # Case 1: small hidden (H=32 < 128) -> exercises the lane-packed path.
    kx, kw, kb = jax.random.split(key, 3)
    batch, seq, hidden = 2, 8, 32
    x = jax.random.normal(kx, (batch, seq, hidden), dtype=jnp.float32)
    weight = 1.0 + 0.01 * jax.random.normal(kw, (hidden,), dtype=jnp.float32)
    bias = 0.01 * jax.random.normal(kb, (hidden,), dtype=jnp.float32)

    out = jax.block_until_ready(ipex_fast_layer_norm(x, weight, bias, eps))
    ref = _reference_layer_norm(x, weight, bias, eps)
    assert out.shape == x.shape and out.dtype == x.dtype
    assert jnp.allclose(out, ref, atol=2e-5, rtol=2e-5)

    # Case 2: lane-dense hidden (H=256, multiple of 128) -> plain path, 2-step grid.
    kx2, kw2, kb2 = jax.random.split(jax.random.PRNGKey(0), 3)
    hidden2 = 256
    x2 = jax.random.normal(kx2, (batch, seq, hidden2), dtype=jnp.float32)
    w2 = 1.0 + 0.01 * jax.random.normal(kw2, (hidden2,), dtype=jnp.float32)
    b2 = 0.01 * jax.random.normal(kb2, (hidden2,), dtype=jnp.float32)

    out2 = jax.block_until_ready(ipex_fast_layer_norm(x2, w2, b2, eps))
    ref2 = _reference_layer_norm(x2, w2, b2, eps)
    assert out2.shape == x2.shape and out2.dtype == x2.dtype
    assert jnp.allclose(out2, ref2, atol=2e-5, rtol=2e-5)

    print("KERNEL_OK")
</pallas_src>

<mosaic_0001>
module attributes {stable_mosaic.version = 11 : i64} {
  func.func @_layernorm_kernel(%arg0: i32, %arg1: memref<8x128xf32, #tpu.memory_space<vmem>>, %arg2: memref<1x32xf32, #tpu.memory_space<vmem>>, %arg3: memref<1x32xf32, #tpu.memory_space<vmem>>, %arg4: memref<8x128xf32, #tpu.memory_space<vmem>>) attributes {dimension_semantics = [#tpu.dimension_semantics<parallel>], iteration_bounds = array<i64: 1>, scalar_prefetch = 0 : i64, scratch_operands = 0 : i64, tpu.core_type = #tpu.core_type<tc>, window_params = [{transform_indices = @transform_0, window_bounds = array<i64: 8, 128>}, {pipeline_mode = #tpu.pipeline_mode<synchronous>, transform_indices = @transform_1, window_bounds = array<i64: 1, 32>}, {pipeline_mode = #tpu.pipeline_mode<synchronous>, transform_indices = @transform_2, window_bounds = array<i64: 1, 32>}, {transform_indices = @transform_3, window_bounds = array<i64: 8, 128>}]} {
    %c0 = arith.constant 0 : index
    %c0_0 = arith.constant 0 : index
    %0 = vector.load %arg1[%c0, %c0_0] : memref<8x128xf32, #tpu.memory_space<vmem>>, vector<8x128xf32>
    %c0_1 = arith.constant 0 : index
    %c0_2 = arith.constant 0 : index
    %1 = vector.load %arg2[%c0_1, %c0_2] : memref<1x32xf32, #tpu.memory_space<vmem>>, vector<1x32xf32>
    %c0_3 = arith.constant 0 : index
    %c0_4 = arith.constant 0 : index
    %2 = vector.load %arg3[%c0_3, %c0_4] : memref<1x32xf32, #tpu.memory_space<vmem>>, vector<1x32xf32>
    %3 = vector.extract_strided_slice %0 {offsets = [0, 0], sizes = [8, 32], strides = [1, 1]} : vector<8x128xf32> to vector<8x32xf32>
    %cst = arith.constant dense<0.000000e+00> : vector<8xf32>
    %4 = vector.multi_reduction <add>, %3, %cst [1] : vector<8x32xf32> to vector<8xf32>
    %5 = vector.shape_cast %4 : vector<8xf32> to vector<8x1xf32>
    %cst_5 = arith.constant 3.125000e-02 : f32
    %6 = vector.broadcast %cst_5 : f32 to vector<8x1xf32>
    %7 = arith.mulf %5, %6 : vector<8x1xf32>
    %8 = vector.broadcast %7 : vector<8x1xf32> to vector<8x32xf32>
    %9 = arith.subf %3, %8 : vector<8x32xf32>
    %10 = arith.mulf %9, %9 : vector<8x32xf32>
    %cst_6 = arith.constant dense<0.000000e+00> : vector<8xf32>
    %11 = vector.multi_reduction <add>, %10, %cst_6 [1] : vector<8x32xf32> to vector<8xf32>
    %12 = vector.shape_cast %11 : vector<8xf32> to vector<8x1xf32>
    %cst_7 = arith.constant 3.125000e-02 : f32
    %13 = vector.broadcast %cst_7 : f32 to vector<8x1xf32>
    %14 = arith.mulf %12, %13 : vector<8x1xf32>
    %cst_8 = arith.constant 9.99999974E-6 : f32
    %15 = vector.broadcast %cst_8 : f32 to vector<8x1xf32>
    %16 = arith.addf %14, %15 : vector<8x1xf32>
    %17 = math.rsqrt %16 : vector<8x1xf32>
    %18 = vector.broadcast %17 : vector<8x1xf32> to vector<8x32xf32>
    %19 = arith.mulf %9, %18 : vector<8x32xf32>
    %20 = vector.broadcast %1 : vector<1x32xf32> to vector<8x32xf32>
    %21 = arith.mulf %19, %20 : vector<8x32xf32>
    %22 = vector.broadcast %2 : vector<1x32xf32> to vector<8x32xf32>
    %23 = arith.addf %21, %22 : vector<8x32xf32>
    %24 = vector.extract_strided_slice %0 {offsets = [0, 32], sizes = [8, 32], strides = [1, 1]} : vector<8x128xf32> to vector<8x32xf32>
    %cst_9 = arith.constant dense<0.000000e+00> : vector<8xf32>
    %25 = vector.multi_reduction <add>, %24, %cst_9 [1] : vector<8x32xf32> to vector<8xf32>
    %26 = vector.shape_cast %25 : vector<8xf32> to vector<8x1xf32>
    %cst_10 = arith.constant 3.125000e-02 : f32
    %27 = vector.broadcast %cst_10 : f32 to vector<8x1xf32>
    %28 = arith.mulf %26, %27 : vector<8x1xf32>
    %29 = vector.broadcast %28 : vector<8x1xf32> to vector<8x32xf32>
    %30 = arith.subf %24, %29 : vector<8x32xf32>
    %31 = arith.mulf %30, %30 : vector<8x32xf32>
    %cst_11 = arith.constant dense<0.000000e+00> : vector<8xf32>
    %32 = vector.multi_reduction <add>, %31, %cst_11 [1] : vector<8x32xf32> to vector<8xf32>
    %33 = vector.shape_cast %32 : vector<8xf32> to vector<8x1xf32>
    %cst_12 = arith.constant 3.125000e-02 : f32
    %34 = vector.broadcast %cst_12 : f32 to vector<8x1xf32>
    %35 = arith.mulf %33, %34 : vector<8x1xf32>
    %cst_13 = arith.constant 9.99999974E-6 : f32
    %36 = vector.broadcast %cst_13 : f32 to vector<8x1xf32>
    %37 = arith.addf %35, %36 : vector<8x1xf32>
    %38 = math.rsqrt %37 : vector<8x1xf32>
    %39 = vector.broadcast %38 : vector<8x1xf32> to vector<8x32xf32>
    %40 = arith.mulf %30, %39 : vector<8x32xf32>
    %41 = vector.broadcast %1 : vector<1x32xf32> to vector<8x32xf32>
    %42 = arith.mulf %40, %41 : vector<8x32xf32>
    %43 = vector.broadcast %2 : vector<1x32xf32> to vector<8x32xf32>
    %44 = arith.addf %42, %43 : vector<8x32xf32>
    %45 = vector.extract_strided_slice %0 {offsets = [0, 64], sizes = [8, 32], strides = [1, 1]} : vector<8x128xf32> to vector<8x32xf32>
    %cst_14 = arith.constant dense<0.000000e+00> : vector<8xf32>
    %46 = vector.multi_reduction <add>, %45, %cst_14 [1] : vector<8x32xf32> to vector<8xf32>
    %47 = vector.shape_cast %46 : vector<8xf32> to vector<8x1xf32>
    %cst_15 = arith.constant 3.125000e-02 : f32
    %48 = vector.broadcast %cst_15 : f32 to vector<8x1xf32>
    %49 = arith.mulf %47, %48 : vector<8x1xf32>
    %50 = vector.broadcast %49 : vector<8x1xf32> to vector<8x32xf32>
    %51 = arith.subf %45, %50 : vector<8x32xf32>
    %52 = arith.mulf %51, %51 : vector<8x32xf32>
    %cst_16 = arith.constant dense<0.000000e+00> : vector<8xf32>
    %53 = vector.multi_reduction <add>, %52, %cst_16 [1] : vector<8x32xf32> to vector<8xf32>
    %54 = vector.shape_cast %53 : vector<8xf32> to vector<8x1xf32>
    %cst_17 = arith.constant 3.125000e-02 : f32
    %55 = vector.broadcast %cst_17 : f32 to vector<8x1xf32>
    %56 = arith.mulf %54, %55 : vector<8x1xf32>
    %cst_18 = arith.constant 9.99999974E-6 : f32
    %57 = vector.broadcast %cst_18 : f32 to vector<8x1xf32>
    %58 = arith.addf %56, %57 : vector<8x1xf32>
    %59 = math.rsqrt %58 : vector<8x1xf32>
    %60 = vector.broadcast %59 : vector<8x1xf32> to vector<8x32xf32>
    %61 = arith.mulf %51, %60 : vector<8x32xf32>
    %62 = vector.broadcast %1 : vector<1x32xf32> to vector<8x32xf32>
    %63 = arith.mulf %61, %62 : vector<8x32xf32>
    %64 = vector.broadcast %2 : vector<1x32xf32> to vector<8x32xf32>
    %65 = arith.addf %63, %64 : vector<8x32xf32>
    %66 = vector.extract_strided_slice %0 {offsets = [0, 96], sizes = [8, 32], strides = [1, 1]} : vector<8x128xf32> to vector<8x32xf32>
    %cst_19 = arith.constant dense<0.000000e+00> : vector<8xf32>
    %67 = vector.multi_reduction <add>, %66, %cst_19 [1] : vector<8x32xf32> to vector<8xf32>
    %68 = vector.shape_cast %67 : vector<8xf32> to vector<8x1xf32>
    %cst_20 = arith.constant 3.125000e-02 : f32
    %69 = vector.broadcast %cst_20 : f32 to vector<8x1xf32>
    %70 = arith.mulf %68, %69 : vector<8x1xf32>
    %71 = vector.broadcast %70 : vector<8x1xf32> to vector<8x32xf32>
    %72 = arith.subf %66, %71 : vector<8x32xf32>
    %73 = arith.mulf %72, %72 : vector<8x32xf32>
    %cst_21 = arith.constant dense<0.000000e+00> : vector<8xf32>
    %74 = vector.multi_reduction <add>, %73, %cst_21 [1] : vector<8x32xf32> to vector<8xf32>
    %75 = vector.shape_cast %74 : vector<8xf32> to vector<8x1xf32>
    %cst_22 = arith.constant 3.125000e-02 : f32
    %76 = vector.broadcast %cst_22 : f32 to vector<8x1xf32>
    %77 = arith.mulf %75, %76 : vector<8x1xf32>
    %cst_23 = arith.constant 9.99999974E-6 : f32
    %78 = vector.broadcast %cst_23 : f32 to vector<8x1xf32>
    %79 = arith.addf %77, %78 : vector<8x1xf32>
    %80 = math.rsqrt %79 : vector<8x1xf32>
    %81 = vector.broadcast %80 : vector<8x1xf32> to vector<8x32xf32>
    %82 = arith.mulf %72, %81 : vector<8x32xf32>
    %83 = vector.broadcast %1 : vector<1x32xf32> to vector<8x32xf32>
    %84 = arith.mulf %82, %83 : vector<8x32xf32>
    %85 = vector.broadcast %2 : vector<1x32xf32> to vector<8x32xf32>
    %86 = arith.addf %84, %85 : vector<8x32xf32>
    %87 = tpu.concatenate %23, %44, %65, %86 in 1 : vector<8x32xf32>, vector<8x32xf32>, vector<8x32xf32>, vector<8x32xf32> -> vector<8x128xf32>
    %c0_24 = arith.constant 0 : index
    %c0_25 = arith.constant 0 : index
    %88 = vector.load %arg4[%c0_24, %c0_25] : memref<8x128xf32, #tpu.memory_space<vmem>>, vector<8x128xf32>
    tpu.vector_store %arg4[%c0_24, %c0_25], %87 {strides = array<i32>} : memref<8x128xf32, #tpu.memory_space<vmem>>, vector<8x128xf32>,
    return
  }
  func.func @transform_0(%arg0: i32) -> (i32, i32) {
    %c0_i32 = arith.constant 0 : i32
    %c0_i32_0 = arith.constant 0 : i32
    return %arg0, %c0_i32 : i32, i32
  }
  func.func @transform_1(%arg0: i32) -> (i32, i32) {
    %c0_i32 = arith.constant 0 : i32
    %c0_i32_0 = arith.constant 0 : i32
    %c0_i32_1 = arith.constant 0 : i32
    return %c0_i32, %c0_i32_0 : i32, i32
  }
  func.func @transform_2(%arg0: i32) -> (i32, i32) {
    %c0_i32 = arith.constant 0 : i32
    %c0_i32_0 = arith.constant 0 : i32
    %c0_i32_1 = arith.constant 0 : i32
    return %c0_i32, %c0_i32_0 : i32, i32
  }
  func.func @transform_3(%arg0: i32) -> (i32, i32) {
    %c0_i32 = arith.constant 0 : i32
    %c0_i32_0 = arith.constant 0 : i32
    return %arg0, %c0_i32 : i32, i32
  }
}

</mosaic_0001>

<llo_original>
// kernel: tpu_custom_call.1
$region0: #{tpu_custom_call.1}
  #allocation0 [shape = 'u32[]', space=smem, size = 0x4, offset = 0x4, fixed_abs, tag = 'smem constant byte address 0x4 - core index']
  #allocation1 [shape = 'u32[72,128]{1,0:T(1,128)}', space=vmem, size = 0x9000, scoped, tag = 'internal scratch']
  %s0 = inlined_call_operand.hbm [shape: f32[8,128], index: 0, kind: input, shape index: {}]
  %s1 = inlined_call_operand.hbm [shape: f32[1,32], index: 1, kind: input, shape index: {}]
  %s2 = inlined_call_operand.vmem [shape: f32[1,32], index: 2, kind: input, shape index: {}]
  %s3 = inlined_call_operand.hbm [shape: f32[8,128], index: 3, kind: output, shape index: {}]
  %s4 = sld [smem:[#allocation0]]
  $region30: #{tpu_custom_call.1} parent=0
    _
  %s6 = ssub.s32 1, %s4
  %s7 = scalar_select 0, %s6, %s4
  $region1: #{tpu_custom_call.1} parent=0
    #allocation2 [shape = 'u8[4096]{0}', space=vmem, size = 0x1000, scoped, tag = 'input window, operand 0, single buffered']
    #allocation3 [shape = 's32[1]{0}', space=sflag, size = 0x4, scoped, tag = 'scoped memory for tpu_custom_call.1']
    #allocation4 [shape = 's32[1]{0}', space=sflag, size = 0x4, scoped, tag = 'scoped memory for tpu_custom_call.1']
    #allocation5 [shape = 'u8[512]{0}', space=vmem, size = 0x400, scoped, tag = 'input window, operand 1, single buffered']
    #allocation6 [shape = 's32[1]{0}', space=sflag, size = 0x4, scoped, tag = 'scoped memory for tpu_custom_call.1']
    #allocation7 [shape = 'u8[4096]{0}', space=vmem, size = 0x1000, scoped, tag = 'output window, operand 0, single buffered']
    %8 = vsyncpa [#allocation3], 0
    %9 = vsyncpa [#allocation6], 0
    %10 = vsyncpa [#allocation4], 0
    // Predicated region
    $region2: #{tpu_custom_call.1} parent=1 // pred_check
      _
    $region3: #{tpu_custom_call.1} parent=1 // pred_check_branch
      %12 = sbr.rel (0) target = $region5
    $region4: #{tpu_custom_call.1} parent=1 // pred_region
      %14 = vsyncadd [#allocation3], 0
      %s16 = sshll.u32 %s0, 4
      %s17 = int_to_ptr.hbm [resolvable:$true] %s16
      %s18 = sshll.u32 [#allocation2], 4
      %s19 = int_to_ptr.vmem [resolvable:$true] %s18
      %21 = dma.hbm_to_vmem [thread:$0]  %s17, 128, %s19, [#allocation3]
    $region5: #{tpu_custom_call.1} parent=1 // pred_fallthru
      _
    // Predicated region
    $region6: #{tpu_custom_call.1} parent=1 // pred_check
      _
    $region7: #{tpu_custom_call.1} parent=1 // pred_check_branch
      %23 = sbr.rel (0) target = $region9
    $region8: #{tpu_custom_call.1} parent=1 // pred_region
      %25 = vsyncadd [#allocation6], 0
      %s27 = sshll.u32 %s1, 4
      %s28 = int_to_ptr.hbm [resolvable:$true] %s27
      %s29 = sshll.u32 [#allocation5], 4
      %s30 = int_to_ptr.vmem [resolvable:$true] %s29
      %32 = dma.hbm_to_vmem [thread:$0]  %s28, 16, %s30, [#allocation6]
    $region9: #{tpu_custom_call.1} parent=1 // pred_fallthru
      _
    // Predicated region
    $region10: #{tpu_custom_call.1} parent=1 // pred_check
      _
    $region11: #{tpu_custom_call.1} parent=1 // pred_check_branch
      %34 = sbr.rel (0) target = $region13
    $region12: #{tpu_custom_call.1} parent=1 // pred_region
      _
    $region13: #{tpu_custom_call.1} parent=1 // pred_fallthru
      _
    // Predicated region
    $region14: #{tpu_custom_call.1} parent=1 // pred_check
      _
    $region15: #{tpu_custom_call.1} parent=1 // pred_check_branch
      %36 = sbr.rel (0) target = $region17
    $region16: #{tpu_custom_call.1} parent=1 // pred_region
      %38 = dma.done [#allocation3], 128
    $region17: #{tpu_custom_call.1} parent=1 // pred_fallthru
      _
    // Predicated region
    $region18: #{tpu_custom_call.1} parent=1 // pred_check
      _
    $region19: #{tpu_custom_call.1} parent=1 // pred_check_branch
      %40 = sbr.rel (0) target = $region21
    $region20: #{tpu_custom_call.1} parent=1 // pred_region
      %42 = dma.done [#allocation6], 16
    $region21: #{tpu_custom_call.1} parent=1 // pred_fallthru
      _
    %v43 = vld [vmem:[#allocation2] sm:$0xff]
    %v44 = vld [vmem:[#allocation5] sm:$0x1]
    %v45 = vld [vmem:[%s2] sm:$0x1]
    %vm46 = vcmask 261120
    %v47 = vsel %vm46, %v43, 0.0
    %48 = vadd.xlane.f32.xlu0 %v47
    %v49 = vpop.xlane.xlu0 %48
    %v50 = vmul.f32 %v49, 0.03125
    %v51 = vsub.f32 %v43, %v50
    %v52 = vmul.f32 %v51, %v51
    %v53 = vsel %vm46, %v52, 0.0
    %54 = vadd.xlane.f32.xlu0 %v53
    %v55 = vpop.xlane.xlu0 %54
    %v56 = vmul.f32 %v55, 0.03125
    %v57 = vadd.f32 %v56, 1e-05
    %v58 = vrsqrt.pop %v57
    %v59 = vmul.f32 %v58, %v57
    %v60 = vmul.f32 %v59, %v58
    %v61 = vmul.f32 0.5, %v60
    %v62 = vsub.f32 1.5, %v61
    %v63 = vmul.f32 %v58, %v62
    %vm64 = vweird.f32 %v57
    %vm65 = vweird.f32 %v58
    %vm66 = vmor %vm64, %vm65
    %v67 = vsel %vm66, %v58, %v63
    %v68 = vmul.f32 %v51, %v67
    %v70 = vperm.slane %v44, 0
    %v72 = vmul.f32 %v68, %v70
    %v74 = vperm.slane %v45, 0
    %v76 = vadd.f32 %v72, %v74
    %78 = vrot.lane.b32.xlu0 %v43, 96
    %v79 = vpop.permute.xlu0 %78
    %v81 = vsel %vm46, %v79, 0.0
    %82 = vadd.xlane.f32.xlu0 %v81
    %v83 = vpop.xlane.xlu0 %82
    %v84 = vmul.f32 %v83, 0.03125
    %v85 = vsub.f32 %v43, %v84
    %v86 = vmul.f32 %v85, %v85
    %88 = vrot.lane.b32.xlu0 %v86, 96
    %v89 = vpop.permute.xlu0 %88
    %v91 = vsel %vm46, %v89, 0.0
    %92 = vadd.xlane.f32.xlu0 %v91
    %v93 = vpop.xlane.xlu0 %92
    %v94 = vmul.f32 %v93, 0.03125
    %v95 = vadd.f32 %v94, 1e-05
    %v96 = vrsqrt.pop %v95
    %v97 = vmul.f32 %v96, %v95
    %v98 = vmul.f32 %v97, %v96
    %v99 = vmul.f32 0.5, %v98
    %v100 = vsub.f32 1.5, %v99
    %v101 = vmul.f32 %v96, %v100
    %vm102 = vweird.f32 %v95
    %vm103 = vweird.f32 %v96
    %vm104 = vmor %vm102, %vm103
    %v105 = vsel %vm104, %v96, %v101
    %v106 = vmul.f32 %v85, %v105
    %107 = vrot.lane.b32.xlu0 %v70, 32
    %v108 = vpop.permute.xlu0 %107
    %v110 = vmul.f32 %v106, %v108
    %111 = vrot.lane.b32.xlu0 %v74, 32
    %v112 = vpop.permute.xlu0 %111
    %v114 = vadd.f32 %v110, %v112
    %115 = vrot.lane.b32.xlu0 %v43, 64
    %v116 = vpop.permute.xlu0 %115
    %v118 = vsel %vm46, %v116, 0.0
    %119 = vadd.xlane.f32.xlu0 %v118
    %v120 = vpop.xlane.xlu0 %119
    %v121 = vmul.f32 %v120, 0.03125
    %v122 = vsub.f32 %v43, %v121
    %v123 = vmul.f32 %v122, %v122
    %125 = vrot.lane.b32.xlu0 %v123, 64
    %v126 = vpop.permute.xlu0 %125
    %v128 = vsel %vm46, %v126, 0.0
    %129 = vadd.xlane.f32.xlu0 %v128
    %v130 = vpop.xlane.xlu0 %129
    %v131 = vmul.f32 %v130, 0.03125
    %v132 = vadd.f32 %v131, 1e-05
    %v133 = vrsqrt.pop %v132
    %v134 = vmul.f32 %v133, %v132
    %v135 = vmul.f32 %v134, %v133
    %v136 = vmul.f32 0.5, %v135
    %v137 = vsub.f32 1.5, %v136
    %v138 = vmul.f32 %v133, %v137
    %vm139 = vweird.f32 %v132
    %vm140 = vweird.f32 %v133
    %vm141 = vmor %vm139, %vm140
    %v142 = vsel %vm141, %v133, %v138
    %v143 = vmul.f32 %v122, %v142
    %144 = vrot.lane.b32.xlu0 %v70, 64
    %v145 = vpop.permute.xlu0 %144
    %v147 = vmul.f32 %v143, %v145
    %148 = vrot.lane.b32.xlu0 %v74, 64
    %v149 = vpop.permute.xlu0 %148
    %v151 = vadd.f32 %v147, %v149
    %152 = vrot.lane.b32.xlu0 %v43, 32
    %v153 = vpop.permute.xlu0 %152
    %v155 = vsel %vm46, %v153, 0.0
    %156 = vadd.xlane.f32.xlu0 %v155
    %v157 = vpop.xlane.xlu0 %156
    %v158 = vmul.f32 %v157, 0.03125
    %v159 = vsub.f32 %v43, %v158
    %v160 = vmul.f32 %v159, %v159
    %162 = vrot.lane.b32.xlu0 %v160, 32
    %v163 = vpop.permute.xlu0 %162
    %v165 = vsel %vm46, %v163, 0.0
    %166 = vadd.xlane.f32.xlu0 %v165
    %v167 = vpop.xlane.xlu0 %166
    %v168 = vmul.f32 %v167, 0.03125
    %v169 = vadd.f32 %v168, 1e-05
    %v170 = vrsqrt.pop %v169
    %v171 = vmul.f32 %v170, %v169
    %v172 = vmul.f32 %v171, %v170
    %v173 = vmul.f32 0.5, %v172
    %v174 = vsub.f32 1.5, %v173
    %v175 = vmul.f32 %v170, %v174
    %vm176 = vweird.f32 %v169
    %vm177 = vweird.f32 %v170
    %vm178 = vmor %vm176, %vm177
    %v179 = vsel %vm178, %v170, %v175
    %v180 = vmul.f32 %v159, %v179
    %181 = vrot.lane.b32.xlu0 %v70, 96
    %v182 = vpop.permute.xlu0 %181
    %v184 = vmul.f32 %v180, %v182
    %185 = vrot.lane.b32.xlu0 %v74, 96
    %v186 = vpop.permute.xlu0 %185
    %v188 = vadd.f32 %v184, %v186
    %v189 = vsel %vm46, %v76, %v114
    %vm190 = vcmask 523264
    %v191 = vsel %vm190, %v189, %v151
    %vm192 = vcmask 785408
    %v193 = vsel %vm192, %v191, %v188
    %194 = vst [vmem:[#allocation7] sm:$0xff] %v193
    // Predicated region
    $region22: #{tpu_custom_call.1} parent=1 // pred_check
      _
    $region23: #{tpu_custom_call.1} parent=1 // pred_check_branch
      %196 = sbr.rel (0) target = $region25
    $region24: #{tpu_custom_call.1} parent=1 // pred_region
      %198 = vsyncadd [#allocation4], 0
      %s200 = sshll.u32 [#allocation7], 4
      %s201 = int_to_ptr.vmem [resolvable:$true] %s200
      %s202 = sshll.u32 %s3, 4
      %s203 = int_to_ptr.hbm [resolvable:$true] %s202
      %205 = dma.vmem_to_hbm [thread:$0]  %s201, 128, %s203, [#allocation4]
    $region25: #{tpu_custom_call.1} parent=1 // pred_fallthru
      _
    // Predicated region
    $region26: #{tpu_custom_call.1} parent=1 // pred_check
      _
    $region27: #{tpu_custom_call.1} parent=1 // pred_check_branch
      %207 = sbr.rel (0) target = $region29
    $region28: #{tpu_custom_call.1} parent=1 // pred_region
      %209 = dma.done [#allocation4], 128
    $region29: #{tpu_custom_call.1} parent=1 // pred_fallthru
      _
    %210 = vsyncpa [#allocation3], 1
    %211 = vsyncpa [#allocation6], 1
    %212 = vsyncpa [#allocation4], 1

</llo_original>
